<compile_context>
chip_gen: v7x
topology: tpu7x:2x2x1
jax: 0.10.0
libtpu: 0.0.40
codegen_flags: <defaults>
</compile_context>

<pallas_src>
import functools

import jax
import jax.numpy as jnp
from jax import lax
from jax.experimental import pallas as pl
from jax.experimental.pallas import tpu as pltpu


def _combined_loss_kernel(hm_ref, f_ref, side_ref, out_ref, *, inv_x, inv_y, inv_z):
    # hm_ref   : (TM, Lp)   heatmaps, native dtype (rows = batch*joint)
    # f_ref    : (4,  Lp)   resident lane-dense coord weights [x; y; z; 1] (f32)
    # side_ref : (TM, 16)   packed [gt xyz | tch xyz | vis_sup xyz | vis_uns xyz | valid | pad]
    # out_ref  : (1, 1, 128) packed partial sums [smp, tmp, lsup, luns, 0, ...]
    hm = hm_ref[...]
    m = jnp.max(hm, axis=-1, keepdims=True)              # exact in native dtype (XLU)
    p = jnp.exp((hm - m).astype(jnp.float32))             # fused cast, EUP, (TM, Lp) f32

    # All four weighted sums in ONE skinny MXU matmul, contracting on the shared
    # lane axis L (no transpose / no (L,4) lane padding): sums = p @ F.T -> (TM, 4)
    sums = lax.dot_general(p, f_ref[...], (((1,), (1,)), ((), ())),
                           preferred_element_type=jnp.float32)

    # Deferred softmax normalization: divide only the (TM,1) numerators.
    inv_den = pl.reciprocal(sums[:, 3:4], approx=False)
    cx = sums[:, 0:1] * inv_den * inv_x - 0.5
    cy = sums[:, 1:2] * inv_den * inv_y - 0.5
    cz = sums[:, 2:3] * inv_den * inv_z - 0.5

    side = side_ref[...]
    gtx, gty, gtz = side[:, 0:1], side[:, 1:2], side[:, 2:3]
    tx, ty, tz = side[:, 3:4], side[:, 4:5], side[:, 5:6]
    vsx, vsy, vsz = side[:, 6:7], side[:, 7:8], side[:, 8:9]       # gt_vis * labelled
    vux, vuy, vuz = side[:, 9:10], side[:, 10:11], side[:, 11:12]  # gt_vis * ~labelled
    valid = side[:, 12:13]                                          # 0 for padded rows

    dx, dy, dz = cx - gtx, cy - gty, cz - gtz
    ex, ey, ez = tx - gtx, ty - gty, tz - gtz

    # MPJPE partial sums (mean taken in the wrapper); padded rows masked by `valid`.
    smp = jnp.sum(jnp.sqrt(dx * dx + dy * dy + dz * dz) * valid)
    tmp = jnp.sum(jnp.sqrt(ex * ex + ey * ey + ez * ez) * valid)
    # Masked L1 partial sums (vis masks are zero for padded rows).
    lsup = jnp.sum(jnp.abs(dx) * vsx + jnp.abs(dy) * vsy + jnp.abs(dz) * vsz)
    luns = jnp.sum(jnp.abs(cx - tx) * vux + jnp.abs(cy - ty) * vuy
                   + jnp.abs(cz - tz) * vuz)

    # One lane-dense packed store per step (single output DMA pipeline).
    lane = lax.broadcasted_iota(jnp.int32, (1, 1, 128), 2)
    out_ref[...] = (jnp.where(lane == 0, smp, 0.0)
                    + jnp.where(lane == 1, tmp, 0.0)
                    + jnp.where(lane == 2, lsup, 0.0)
                    + jnp.where(lane == 3, luns, 0.0)).astype(jnp.float32)


def combined_loss(heatmap_out, coord_out_teacher, gt_coord, gt_vis, labelled,
                  *, num_joints):
    """Returns (loss, student_mpjpe, teacher_mpjpe, loss_supervised, loss_unsupervised)."""
    B = heatmap_out.shape[0]
    W = heatmap_out.shape[-1]
    H = heatmap_out.shape[-2]
    D = heatmap_out.shape[-3] // num_joints
    J = num_joints
    L = D * H * W
    rows = B * J
    f32 = jnp.float32

    # ---- flatten batch*joint into one row axis; lane-pad L to a multiple of 128.
    hm2 = heatmap_out.reshape(rows, L)                    # native dtype preserved
    itemsize = max(int(jnp.dtype(hm2.dtype).itemsize), 1)
    Lp = ((L + 127) // 128) * 128

    # ---- per-generation VMEM budget (query, don't hard-code).
    try:
        vmem_cap = int(pltpu.get_tpu_info().vmem_capacity_bytes)
    except Exception:
        vmem_cap = 64 << 20
    vmem_limit = int(min(max(vmem_cap - (16 << 20), 32 << 20), 96 << 20))

    # Live set per step ~ 2x double-buffered native input + f32 intermediate + p.
    bytes_per_row = Lp * (2 * itemsize + 8)
    budget = min(vmem_limit // 2, 24 << 20)
    tm = max(8, min(1024, (budget // max(bytes_per_row, 1)) // 8 * 8))
    # Keep >= ~8 grid steps when there is enough work so ("parallel",) feeds
    # both v7x TensorCores and the DMA pipeline stays full.
    tm = min(tm, max(8, ((rows + 63) // 64) * 8))
    rows_padded = ((rows + tm - 1) // tm) * tm
    G = rows_padded // tm
    # TODO(synk): for production-size heatmaps (L ~ 64^3) add a second "arbitrary"
    # grid axis over L chunks with online-max accumulation so the per-step live
    # set stays bounded on v7x's 64 MiB VMEM.

    # ---- pad heatmap rows/lanes with a large negative (exp -> 0, max unaffected).
    if jnp.issubdtype(hm2.dtype, jnp.floating):
        neg = float(max(-1e9, float(jnp.finfo(hm2.dtype).min) / 4.0))
    else:
        neg = -1e9
    hm_p = jnp.pad(hm2, ((0, rows_padded - rows), (0, Lp - L)), constant_values=neg)

    # ---- resident lane-dense coordinate-weight matrix F = [x; y; z; 1], (4, Lp).
    idx = jnp.arange(Lp, dtype=jnp.int32)
    real = (idx < L).astype(f32)
    fmat = jnp.stack([
        (idx % W).astype(f32) * real,
        ((idx // W) % H).astype(f32) * real,
        (idx // (W * H)).astype(f32) * real,
        real,
    ], axis=0)

    # ---- packed per-row side data: (rows_padded, 16), one DMA per step.
    gt = gt_coord.reshape(rows, 3).astype(f32)
    tch = jnp.squeeze(coord_out_teacher, axis=0).reshape(rows, 3).astype(f32)
    vis = gt_vis.reshape(rows, 3).astype(f32)
    lab = jnp.repeat(labelled.astype(f32), J)[:, None]    # (rows, 1)
    side = jnp.concatenate([
        gt, tch, vis * lab, vis * (1.0 - lab),
        jnp.ones((rows, 1), f32), jnp.zeros((rows, 3), f32)], axis=1)
    side = jnp.pad(side, ((0, rows_padded - rows), (0, 0)))

    kernel = functools.partial(_combined_loss_kernel,
                               inv_x=1.0 / W, inv_y=1.0 / H, inv_z=1.0 / D)

    cost = pl.CostEstimate(
        flops=2 * rows_padded * Lp * 4 + 32 * rows_padded,
        transcendentals=rows_padded * Lp,
        bytes_accessed=rows_padded * Lp * itemsize + rows_padded * 64
                       + Lp * 16 + G * 512)

    def _run(buffered_f):
        if buffered_f:
            f_spec = pl.BlockSpec((4, Lp), lambda g: (0, 0),
                                  pipeline_mode=pl.Buffered(1))
        else:
            f_spec = pl.BlockSpec((4, Lp), lambda g: (0, 0))
        return pl.pallas_call(
            kernel,
            out_shape=jax.ShapeDtypeStruct((G, 1, 128), f32),
            grid_spec=pltpu.PrefetchScalarGridSpec(
                num_scalar_prefetch=0,
                grid=(G,),
                in_specs=[
                    pl.BlockSpec((tm, Lp), lambda g: (g, 0)),   # heatmap rows
                    f_spec,                                     # resident F
                    pl.BlockSpec((tm, 16), lambda g: (g, 0)),   # packed side data
                ],
                out_specs=pl.BlockSpec((1, 1, 128), lambda g: (g, 0, 0)),
            ),
            compiler_params=pltpu.CompilerParams(
                dimension_semantics=("parallel",),              # megacore on v7x
                vmem_limit_bytes=vmem_limit),
            cost_estimate=cost,
        )(hm_p, fmat, side)

    try:
        part = jax.block_until_ready(_run(True))
    except Exception:
        part = _run(False)

    # Tiny wrapper-side final reduce + normalization.
    totals = jnp.sum(part.reshape(G, 128), axis=0)
    n = jnp.float32(rows)
    student_mpjpe = totals[0] / n
    teacher_mpjpe = totals[1] / n
    loss_sup = totals[2]
    loss_uns = totals[3]
    loss = (loss_sup + loss_uns) / jnp.float32(B)
    return loss, student_mpjpe, teacher_mpjpe, loss_sup, loss_uns


def _reference(heatmap, teacher, gt, vis, labelled, J, D, H, W):
    """Pure-JAX re-implementation of the PyTorch forward (teacher term only)."""
    B = heatmap.shape[0]
    preds = jax.nn.softmax(heatmap.reshape(B, J, -1).astype(jnp.float32), axis=2)
    hm5 = preds.reshape(B, J, D, H, W)
    ax = hm5.sum(2).sum(2)                    # (B, J, W)
    ay = hm5.sum(2).sum(3)                    # (B, J, H)
    az = hm5.sum(3).sum(3)                    # (B, J, D)
    x = (ax * jnp.arange(W)).sum(-1) / W - 0.5
    y = (ay * jnp.arange(H)).sum(-1) / H - 0.5
    z = (az * jnp.arange(D)).sum(-1) / D - 0.5
    coord = jnp.stack([x, y, z], axis=-1).reshape(B, J * 3)
    tch = jnp.squeeze(teacher, axis=0)

    def mpjpe(p, g):
        p = p.reshape(B, J, 3)
        g = g.reshape(B, J, 3)
        return jnp.sqrt(((p - g) ** 2).sum(-1)).mean()

    smp = mpjpe(coord, gt)
    tmp = mpjpe(tch, gt)
    lab = labelled.astype(jnp.float32)[:, None]
    lsup = (jnp.abs(coord - gt) * vis * lab).sum()
    luns = (jnp.abs(coord - tch) * vis * (1.0 - lab)).sum()
    loss = (lsup + luns) / B
    return loss, smp, tmp, lsup, luns


if __name__ == "__main__":
    # Small shapes consistent with the forward: B=2, J=4 joints, depth=4, 8x8 heatmaps.
    B, J, D, H, W = 2, 4, 4, 8, 8
    key = jax.random.PRNGKey(0)
    k1, k2, k3, k4 = jax.random.split(key, 4)

    heatmap_out = jax.random.normal(k1, (B, J * D, H, W), jnp.float32)
    gt_coord = jax.random.uniform(k2, (B, J * 3), jnp.float32, -0.5, 0.5)
    coord_out_teacher = jax.random.uniform(k3, (1, B, J * 3), jnp.float32, -0.5, 0.5)
    gt_vis = (jax.random.uniform(k4, (B, J * 3)) > 0.2).astype(jnp.float32)
    labelled = jnp.array([True, False])       # sample 0 supervised, sample 1 unsupervised

    out = combined_loss(heatmap_out, coord_out_teacher, gt_coord, gt_vis,
                        labelled, num_joints=J)
    out = jax.block_until_ready(out)

    ref = _reference(heatmap_out, coord_out_teacher, gt_coord, gt_vis,
                     labelled, J, D, H, W)
    names = ("loss", "student_mpjpe", "teacher_mpjpe", "loss_sup", "loss_unsup")
    for name, a, r in zip(names, out, ref):
        a, r = float(a), float(r)
        assert abs(a - r) <= 1e-3 * max(1.0, abs(r)), (name, a, r)

    print("KERNEL_OK")
</pallas_src>

<mosaic_0001>
module attributes {stable_mosaic.version = 11 : i64} {
  func.func @_combined_loss_kernel(%arg0: i32, %arg1: memref<8x256xf32, #tpu.memory_space<vmem>>, %arg2: memref<4x256xf32, #tpu.memory_space<vmem>>, %arg3: memref<8x16xf32, #tpu.memory_space<vmem>>, %arg4: memref<1x1x128xf32, #tpu.memory_space<vmem>>) attributes {dimension_semantics = [#tpu.dimension_semantics<parallel>], iteration_bounds = array<i64: 1>, scalar_prefetch = 0 : i64, scratch_operands = 0 : i64, tpu.core_type = #tpu.core_type<tc>, window_params = [{transform_indices = @transform_0, window_bounds = array<i64: 8, 256>}, {pipeline_mode = #tpu.pipeline_mode<synchronous>, transform_indices = @transform_1, window_bounds = array<i64: 4, 256>}, {transform_indices = @transform_2, window_bounds = array<i64: 8, 16>}, {transform_indices = @transform_3, window_bounds = array<i64: 1, 1, 128>}]} {
    %c0 = arith.constant 0 : index
    %c0_0 = arith.constant 0 : index
    %0 = vector.load %arg1[%c0, %c0_0] : memref<8x256xf32, #tpu.memory_space<vmem>>, vector<8x256xf32>
    %cst = arith.constant dense<0xFF800000> : vector<8xf32>
    %1 = vector.multi_reduction <maximumf>, %0, %cst [1] : vector<8x256xf32> to vector<8xf32>
    %2 = vector.shape_cast %1 : vector<8xf32> to vector<8x1xf32>
    %3 = vector.broadcast %2 : vector<8x1xf32> to vector<8x256xf32>
    %4 = arith.subf %0, %3 : vector<8x256xf32>
    %5 = math.exp %4 : vector<8x256xf32>
    %c0_1 = arith.constant 0 : index
    %c0_2 = arith.constant 0 : index
    %6 = vector.load %arg2[%c0_1, %c0_2] : memref<4x256xf32, #tpu.memory_space<vmem>>, vector<4x256xf32>
    %cst_3 = arith.constant dense<0.000000e+00> : vector<8x4xf32>
    %7 = tpu.matmul %5, %6, %cst_3 {dimension_numbers = #tpu.dot_dimension_numbers<[1], [1], [0], [0], [0, 0, 1, 0], [], []>} : vector<8x256xf32>, vector<4x256xf32>, vector<8x4xf32> -> vector<8x4xf32>
    %8 = vector.extract_strided_slice %7 {offsets = [0, 3], sizes = [8, 1], strides = [1, 1]} : vector<8x4xf32> to vector<8x1xf32>
    %9 = tpu.reciprocal %8 : vector<8x1xf32> -> vector<8x1xf32>
    %10 = vector.extract_strided_slice %7 {offsets = [0, 0], sizes = [8, 1], strides = [1, 1]} : vector<8x4xf32> to vector<8x1xf32>
    %11 = arith.mulf %10, %9 : vector<8x1xf32>
    %cst_4 = arith.constant 1.250000e-01 : f32
    %12 = vector.broadcast %cst_4 : f32 to vector<8x1xf32>
    %13 = arith.mulf %11, %12 : vector<8x1xf32>
    %cst_5 = arith.constant 5.000000e-01 : f32
    %14 = vector.broadcast %cst_5 : f32 to vector<8x1xf32>
    %15 = arith.subf %13, %14 : vector<8x1xf32>
    %16 = vector.extract_strided_slice %7 {offsets = [0, 1], sizes = [8, 1], strides = [1, 1]} : vector<8x4xf32> to vector<8x1xf32>
    %17 = arith.mulf %16, %9 : vector<8x1xf32>
    %cst_6 = arith.constant 1.250000e-01 : f32
    %18 = vector.broadcast %cst_6 : f32 to vector<8x1xf32>
    %19 = arith.mulf %17, %18 : vector<8x1xf32>
    %cst_7 = arith.constant 5.000000e-01 : f32
    %20 = vector.broadcast %cst_7 : f32 to vector<8x1xf32>
    %21 = arith.subf %19, %20 : vector<8x1xf32>
    %22 = vector.extract_strided_slice %7 {offsets = [0, 2], sizes = [8, 1], strides = [1, 1]} : vector<8x4xf32> to vector<8x1xf32>
    %23 = arith.mulf %22, %9 : vector<8x1xf32>
    %cst_8 = arith.constant 2.500000e-01 : f32
    %24 = vector.broadcast %cst_8 : f32 to vector<8x1xf32>
    %25 = arith.mulf %23, %24 : vector<8x1xf32>
    %cst_9 = arith.constant 5.000000e-01 : f32
    %26 = vector.broadcast %cst_9 : f32 to vector<8x1xf32>
    %27 = arith.subf %25, %26 : vector<8x1xf32>
    %c0_10 = arith.constant 0 : index
    %c0_11 = arith.constant 0 : index
    %28 = vector.load %arg3[%c0_10, %c0_11] : memref<8x16xf32, #tpu.memory_space<vmem>>, vector<8x16xf32>
    %29 = vector.extract_strided_slice %28 {offsets = [0, 0], sizes = [8, 1], strides = [1, 1]} : vector<8x16xf32> to vector<8x1xf32>
    %30 = vector.extract_strided_slice %28 {offsets = [0, 1], sizes = [8, 1], strides = [1, 1]} : vector<8x16xf32> to vector<8x1xf32>
    %31 = vector.extract_strided_slice %28 {offsets = [0, 2], sizes = [8, 1], strides = [1, 1]} : vector<8x16xf32> to vector<8x1xf32>
    %32 = vector.extract_strided_slice %28 {offsets = [0, 3], sizes = [8, 1], strides = [1, 1]} : vector<8x16xf32> to vector<8x1xf32>
    %33 = vector.extract_strided_slice %28 {offsets = [0, 4], sizes = [8, 1], strides = [1, 1]} : vector<8x16xf32> to vector<8x1xf32>
    %34 = vector.extract_strided_slice %28 {offsets = [0, 5], sizes = [8, 1], strides = [1, 1]} : vector<8x16xf32> to vector<8x1xf32>
    %35 = vector.extract_strided_slice %28 {offsets = [0, 6], sizes = [8, 1], strides = [1, 1]} : vector<8x16xf32> to vector<8x1xf32>
    %36 = vector.extract_strided_slice %28 {offsets = [0, 7], sizes = [8, 1], strides = [1, 1]} : vector<8x16xf32> to vector<8x1xf32>
    %37 = vector.extract_strided_slice %28 {offsets = [0, 8], sizes = [8, 1], strides = [1, 1]} : vector<8x16xf32> to vector<8x1xf32>
    %38 = vector.extract_strided_slice %28 {offsets = [0, 9], sizes = [8, 1], strides = [1, 1]} : vector<8x16xf32> to vector<8x1xf32>
    %39 = vector.extract_strided_slice %28 {offsets = [0, 10], sizes = [8, 1], strides = [1, 1]} : vector<8x16xf32> to vector<8x1xf32>
    %40 = vector.extract_strided_slice %28 {offsets = [0, 11], sizes = [8, 1], strides = [1, 1]} : vector<8x16xf32> to vector<8x1xf32>
    %41 = vector.extract_strided_slice %28 {offsets = [0, 12], sizes = [8, 1], strides = [1, 1]} : vector<8x16xf32> to vector<8x1xf32>
    %42 = arith.subf %15, %29 : vector<8x1xf32>
    %43 = arith.subf %21, %30 : vector<8x1xf32>
    %44 = arith.subf %27, %31 : vector<8x1xf32>
    %45 = arith.subf %32, %29 : vector<8x1xf32>
    %46 = arith.subf %33, %30 : vector<8x1xf32>
    %47 = arith.subf %34, %31 : vector<8x1xf32>
    %48 = arith.mulf %42, %42 : vector<8x1xf32>
    %49 = arith.mulf %43, %43 : vector<8x1xf32>
    %50 = arith.addf %48, %49 : vector<8x1xf32>
    %51 = arith.mulf %44, %44 : vector<8x1xf32>
    %52 = arith.addf %50, %51 : vector<8x1xf32>
    %53 = math.sqrt %52 : vector<8x1xf32>
    %54 = arith.mulf %53, %41 : vector<8x1xf32>
    %55 = vector.shape_cast %54 : vector<8x1xf32> to vector<1x8x1xf32>
    %cst_12 = arith.constant dense<0.000000e+00> : vector<1xf32>
    %56 = vector.multi_reduction <add>, %55, %cst_12 [1, 2] : vector<1x8x1xf32> to vector<1xf32>
    %57 = vector.shape_cast %56 : vector<1xf32> to vector<1x1x1xf32>
    %58 = vector.extract %57[0, 0, 0] : f32 from vector<1x1x1xf32>
    %59 = arith.mulf %45, %45 : vector<8x1xf32>
    %60 = arith.mulf %46, %46 : vector<8x1xf32>
    %61 = arith.addf %59, %60 : vector<8x1xf32>
    %62 = arith.mulf %47, %47 : vector<8x1xf32>
    %63 = arith.addf %61, %62 : vector<8x1xf32>
    %64 = math.sqrt %63 : vector<8x1xf32>
    %65 = arith.mulf %64, %41 : vector<8x1xf32>
    %66 = vector.shape_cast %65 : vector<8x1xf32> to vector<1x8x1xf32>
    %cst_13 = arith.constant dense<0.000000e+00> : vector<1xf32>
    %67 = vector.multi_reduction <add>, %66, %cst_13 [1, 2] : vector<1x8x1xf32> to vector<1xf32>
    %68 = vector.shape_cast %67 : vector<1xf32> to vector<1x1x1xf32>
    %69 = vector.extract %68[0, 0, 0] : f32 from vector<1x1x1xf32>
    %70 = math.absf %42 : vector<8x1xf32>
    %71 = arith.mulf %70, %35 : vector<8x1xf32>
    %72 = math.absf %43 : vector<8x1xf32>
    %73 = arith.mulf %72, %36 : vector<8x1xf32>
    %74 = arith.addf %71, %73 : vector<8x1xf32>
    %75 = math.absf %44 : vector<8x1xf32>
    %76 = arith.mulf %75, %37 : vector<8x1xf32>
    %77 = arith.addf %74, %76 : vector<8x1xf32>
    %78 = vector.shape_cast %77 : vector<8x1xf32> to vector<1x8x1xf32>
    %cst_14 = arith.constant dense<0.000000e+00> : vector<1xf32>
    %79 = vector.multi_reduction <add>, %78, %cst_14 [1, 2] : vector<1x8x1xf32> to vector<1xf32>
    %80 = vector.shape_cast %79 : vector<1xf32> to vector<1x1x1xf32>
    %81 = vector.extract %80[0, 0, 0] : f32 from vector<1x1x1xf32>
    %82 = arith.subf %15, %32 : vector<8x1xf32>
    %83 = math.absf %82 : vector<8x1xf32>
    %84 = arith.mulf %83, %38 : vector<8x1xf32>
    %85 = arith.subf %21, %33 : vector<8x1xf32>
    %86 = math.absf %85 : vector<8x1xf32>
    %87 = arith.mulf %86, %39 : vector<8x1xf32>
    %88 = arith.addf %84, %87 : vector<8x1xf32>
    %89 = arith.subf %27, %34 : vector<8x1xf32>
    %90 = math.absf %89 : vector<8x1xf32>
    %91 = arith.mulf %90, %40 : vector<8x1xf32>
    %92 = arith.addf %88, %91 : vector<8x1xf32>
    %93 = vector.shape_cast %92 : vector<8x1xf32> to vector<1x8x1xf32>
    %cst_15 = arith.constant dense<0.000000e+00> : vector<1xf32>
    %94 = vector.multi_reduction <add>, %93, %cst_15 [1, 2] : vector<1x8x1xf32> to vector<1xf32>
    %95 = vector.shape_cast %94 : vector<1xf32> to vector<1x1x1xf32>
    %96 = vector.extract %95[0, 0, 0] : f32 from vector<1x1x1xf32>
    %97 = tpu.iota {dimensions = array<i32: 2>} : vector<1x1x128xi32>
    %c0_i32 = arith.constant 0 : i32
    %98 = vector.broadcast %c0_i32 : i32 to vector<1x1x128xi32>
    %99 = arith.cmpi eq, %97, %98 : vector<1x1x128xi32>
    %cst_16 = arith.constant 0.000000e+00 : f32
    %100 = vector.broadcast %58 : f32 to vector<1x1x128xf32>
    %101 = vector.broadcast %cst_16 : f32 to vector<1x1x128xf32>
    %102 = arith.select %99, %100, %101 : vector<1x1x128xi1>, vector<1x1x128xf32>
    %c1_i32 = arith.constant 1 : i32
    %103 = vector.broadcast %c1_i32 : i32 to vector<1x1x128xi32>
    %104 = arith.cmpi eq, %97, %103 : vector<1x1x128xi32>
    %cst_17 = arith.constant 0.000000e+00 : f32
    %105 = vector.broadcast %69 : f32 to vector<1x1x128xf32>
    %106 = vector.broadcast %cst_17 : f32 to vector<1x1x128xf32>
    %107 = arith.select %104, %105, %106 : vector<1x1x128xi1>, vector<1x1x128xf32>
    %108 = arith.addf %102, %107 : vector<1x1x128xf32>
    %c2_i32 = arith.constant 2 : i32
    %109 = vector.broadcast %c2_i32 : i32 to vector<1x1x128xi32>
    %110 = arith.cmpi eq, %97, %109 : vector<1x1x128xi32>
    %cst_18 = arith.constant 0.000000e+00 : f32
    %111 = vector.broadcast %81 : f32 to vector<1x1x128xf32>
    %112 = vector.broadcast %cst_18 : f32 to vector<1x1x128xf32>
    %113 = arith.select %110, %111, %112 : vector<1x1x128xi1>, vector<1x1x128xf32>
    %114 = arith.addf %108, %113 : vector<1x1x128xf32>
    %c3_i32 = arith.constant 3 : i32
    %115 = vector.broadcast %c3_i32 : i32 to vector<1x1x128xi32>
    %116 = arith.cmpi eq, %97, %115 : vector<1x1x128xi32>
    %cst_19 = arith.constant 0.000000e+00 : f32
    %117 = vector.broadcast %96 : f32 to vector<1x1x128xf32>
    %118 = vector.broadcast %cst_19 : f32 to vector<1x1x128xf32>
    %119 = arith.select %116, %117, %118 : vector<1x1x128xi1>, vector<1x1x128xf32>
    %120 = arith.addf %114, %119 : vector<1x1x128xf32>
    %c0_20 = arith.constant 0 : index
    %c0_21 = arith.constant 0 : index
    %c0_22 = arith.constant 0 : index
    %121 = vector.load %arg4[%c0_20, %c0_21, %c0_22] : memref<1x1x128xf32, #tpu.memory_space<vmem>>, vector<1x1x128xf32>
    tpu.vector_store %arg4[%c0_20, %c0_21, %c0_22], %120 {strides = array<i32>} : memref<1x1x128xf32, #tpu.memory_space<vmem>>, vector<1x1x128xf32>,
    return
  }
  func.func @transform_0(%arg0: i32) -> (i32, i32) {
    %c0_i32 = arith.constant 0 : i32
    %c0_i32_0 = arith.constant 0 : i32
    return %arg0, %c0_i32 : i32, i32
  }
  func.func @transform_1(%arg0: i32) -> (i32, i32) {
    %c0_i32 = arith.constant 0 : i32
    %c0_i32_0 = arith.constant 0 : i32
    %c0_i32_1 = arith.constant 0 : i32
    return %c0_i32, %c0_i32_0 : i32, i32
  }
  func.func @transform_2(%arg0: i32) -> (i32, i32) {
    %c0_i32 = arith.constant 0 : i32
    %c0_i32_0 = arith.constant 0 : i32
    return %arg0, %c0_i32 : i32, i32
  }
  func.func @transform_3(%arg0: i32) -> (i32, i32, i32) {
    %c0_i32 = arith.constant 0 : i32
    %c0_i32_0 = arith.constant 0 : i32
    %c0_i32_1 = arith.constant 0 : i32
    return %arg0, %c0_i32, %c0_i32_0 : i32, i32, i32
  }
}

module attributes {stable_mosaic.version = 11 : i64} {
  func.func @_combined_loss_kernel(%arg0: i32, %arg1: memref<8x256xf32, #tpu.memory_space<vmem>>, %arg2: memref<4x256xf32, #tpu.memory_space<vmem>>, %arg3: memref<8x16xf32, #tpu.memory_space<vmem>>, %arg4: memref<1x1x128xf32, #tpu.memory_space<vmem>>) attributes {dimension_semantics = [#tpu.dimension_semantics<parallel>], iteration_bounds = array<i64: 1>, scalar_prefetch = 0 : i64, scratch_operands = 0 : i64, tpu.core_type = #tpu.core_type<tc>, window_params = [{transform_indices = @transform_0, window_bounds = array<i64: 8, 256>}, {pipeline_mode = #tpu.pipeline_mode<synchronous>, transform_indices = @transform_1, window_bounds = array<i64: 4, 256>}, {transform_indices = @transform_2, window_bounds = array<i64: 8, 16>}, {transform_indices = @transform_3, window_bounds = array<i64: 1, 1, 128>}]} {
    %c0 = arith.constant 0 : index
    %c0_0 = arith.constant 0 : index
    %0 = vector.load %arg1[%c0, %c0_0] : memref<8x256xf32, #tpu.memory_space<vmem>>, vector<8x256xf32>
    %cst = arith.constant dense<0xFF800000> : vector<8xf32>
    %1 = vector.multi_reduction <maximumf>, %0, %cst [1] : vector<8x256xf32> to vector<8xf32>
    %2 = vector.shape_cast %1 : vector<8xf32> to vector<8x1xf32>
    %3 = vector.broadcast %2 : vector<8x1xf32> to vector<8x256xf32>
    %4 = arith.subf %0, %3 : vector<8x256xf32>
    %5 = math.exp %4 : vector<8x256xf32>
    %c0_1 = arith.constant 0 : index
    %c0_2 = arith.constant 0 : index
    %6 = vector.load %arg2[%c0_1, %c0_2] : memref<4x256xf32, #tpu.memory_space<vmem>>, vector<4x256xf32>
    %cst_3 = arith.constant dense<0.000000e+00> : vector<8x4xf32>
    %7 = tpu.matmul %5, %6, %cst_3 {dimension_numbers = #tpu.dot_dimension_numbers<[1], [1], [0], [0], [0, 0, 1, 0], [], []>} : vector<8x256xf32>, vector<4x256xf32>, vector<8x4xf32> -> vector<8x4xf32>
    %8 = vector.extract_strided_slice %7 {offsets = [0, 3], sizes = [8, 1], strides = [1, 1]} : vector<8x4xf32> to vector<8x1xf32>
    %9 = tpu.reciprocal %8 : vector<8x1xf32> -> vector<8x1xf32>
    %10 = vector.extract_strided_slice %7 {offsets = [0, 0], sizes = [8, 1], strides = [1, 1]} : vector<8x4xf32> to vector<8x1xf32>
    %11 = arith.mulf %10, %9 : vector<8x1xf32>
    %cst_4 = arith.constant 1.250000e-01 : f32
    %12 = vector.broadcast %cst_4 : f32 to vector<8x1xf32>
    %13 = arith.mulf %11, %12 : vector<8x1xf32>
    %cst_5 = arith.constant 5.000000e-01 : f32
    %14 = vector.broadcast %cst_5 : f32 to vector<8x1xf32>
    %15 = arith.subf %13, %14 : vector<8x1xf32>
    %16 = vector.extract_strided_slice %7 {offsets = [0, 1], sizes = [8, 1], strides = [1, 1]} : vector<8x4xf32> to vector<8x1xf32>
    %17 = arith.mulf %16, %9 : vector<8x1xf32>
    %cst_6 = arith.constant 1.250000e-01 : f32
    %18 = vector.broadcast %cst_6 : f32 to vector<8x1xf32>
    %19 = arith.mulf %17, %18 : vector<8x1xf32>
    %cst_7 = arith.constant 5.000000e-01 : f32
    %20 = vector.broadcast %cst_7 : f32 to vector<8x1xf32>
    %21 = arith.subf %19, %20 : vector<8x1xf32>
    %22 = vector.extract_strided_slice %7 {offsets = [0, 2], sizes = [8, 1], strides = [1, 1]} : vector<8x4xf32> to vector<8x1xf32>
    %23 = arith.mulf %22, %9 : vector<8x1xf32>
    %cst_8 = arith.constant 2.500000e-01 : f32
    %24 = vector.broadcast %cst_8 : f32 to vector<8x1xf32>
    %25 = arith.mulf %23, %24 : vector<8x1xf32>
    %cst_9 = arith.constant 5.000000e-01 : f32
    %26 = vector.broadcast %cst_9 : f32 to vector<8x1xf32>
    %27 = arith.subf %25, %26 : vector<8x1xf32>
    %c0_10 = arith.constant 0 : index
    %c0_11 = arith.constant 0 : index
    %28 = vector.load %arg3[%c0_10, %c0_11] : memref<8x16xf32, #tpu.memory_space<vmem>>, vector<8x16xf32>
    %29 = vector.extract_strided_slice %28 {offsets = [0, 0], sizes = [8, 1], strides = [1, 1]} : vector<8x16xf32> to vector<8x1xf32>
    %30 = vector.extract_strided_slice %28 {offsets = [0, 1], sizes = [8, 1], strides = [1, 1]} : vector<8x16xf32> to vector<8x1xf32>
    %31 = vector.extract_strided_slice %28 {offsets = [0, 2], sizes = [8, 1], strides = [1, 1]} : vector<8x16xf32> to vector<8x1xf32>
    %32 = vector.extract_strided_slice %28 {offsets = [0, 3], sizes = [8, 1], strides = [1, 1]} : vector<8x16xf32> to vector<8x1xf32>
    %33 = vector.extract_strided_slice %28 {offsets = [0, 4], sizes = [8, 1], strides = [1, 1]} : vector<8x16xf32> to vector<8x1xf32>
    %34 = vector.extract_strided_slice %28 {offsets = [0, 5], sizes = [8, 1], strides = [1, 1]} : vector<8x16xf32> to vector<8x1xf32>
    %35 = vector.extract_strided_slice %28 {offsets = [0, 6], sizes = [8, 1], strides = [1, 1]} : vector<8x16xf32> to vector<8x1xf32>
    %36 = vector.extract_strided_slice %28 {offsets = [0, 7], sizes = [8, 1], strides = [1, 1]} : vector<8x16xf32> to vector<8x1xf32>
    %37 = vector.extract_strided_slice %28 {offsets = [0, 8], sizes = [8, 1], strides = [1, 1]} : vector<8x16xf32> to vector<8x1xf32>
    %38 = vector.extract_strided_slice %28 {offsets = [0, 9], sizes = [8, 1], strides = [1, 1]} : vector<8x16xf32> to vector<8x1xf32>
    %39 = vector.extract_strided_slice %28 {offsets = [0, 10], sizes = [8, 1], strides = [1, 1]} : vector<8x16xf32> to vector<8x1xf32>
    %40 = vector.extract_strided_slice %28 {offsets = [0, 11], sizes = [8, 1], strides = [1, 1]} : vector<8x16xf32> to vector<8x1xf32>
    %41 = vector.extract_strided_slice %28 {offsets = [0, 12], sizes = [8, 1], strides = [1, 1]} : vector<8x16xf32> to vector<8x1xf32>
    %42 = arith.subf %15, %29 : vector<8x1xf32>
    %43 = arith.subf %21, %30 : vector<8x1xf32>
    %44 = arith.subf %27, %31 : vector<8x1xf32>
    %45 = arith.subf %32, %29 : vector<8x1xf32>
    %46 = arith.subf %33, %30 : vector<8x1xf32>
    %47 = arith.subf %34, %31 : vector<8x1xf32>
    %48 = arith.mulf %42, %42 : vector<8x1xf32>
    %49 = arith.mulf %43, %43 : vector<8x1xf32>
    %50 = arith.addf %48, %49 : vector<8x1xf32>
    %51 = arith.mulf %44, %44 : vector<8x1xf32>
    %52 = arith.addf %50, %51 : vector<8x1xf32>
    %53 = math.sqrt %52 : vector<8x1xf32>
    %54 = arith.mulf %53, %41 : vector<8x1xf32>
    %55 = vector.shape_cast %54 : vector<8x1xf32> to vector<1x8x1xf32>
    %cst_12 = arith.constant dense<0.000000e+00> : vector<1xf32>
    %56 = vector.multi_reduction <add>, %55, %cst_12 [1, 2] : vector<1x8x1xf32> to vector<1xf32>
    %57 = vector.shape_cast %56 : vector<1xf32> to vector<1x1x1xf32>
    %58 = vector.extract %57[0, 0, 0] : f32 from vector<1x1x1xf32>
    %59 = arith.mulf %45, %45 : vector<8x1xf32>
    %60 = arith.mulf %46, %46 : vector<8x1xf32>
    %61 = arith.addf %59, %60 : vector<8x1xf32>
    %62 = arith.mulf %47, %47 : vector<8x1xf32>
    %63 = arith.addf %61, %62 : vector<8x1xf32>
    %64 = math.sqrt %63 : vector<8x1xf32>
    %65 = arith.mulf %64, %41 : vector<8x1xf32>
    %66 = vector.shape_cast %65 : vector<8x1xf32> to vector<1x8x1xf32>
    %cst_13 = arith.constant dense<0.000000e+00> : vector<1xf32>
    %67 = vector.multi_reduction <add>, %66, %cst_13 [1, 2] : vector<1x8x1xf32> to vector<1xf32>
    %68 = vector.shape_cast %67 : vector<1xf32> to vector<1x1x1xf32>
    %69 = vector.extract %68[0, 0, 0] : f32 from vector<1x1x1xf32>
    %70 = math.absf %42 : vector<8x1xf32>
    %71 = arith.mulf %70, %35 : vector<8x1xf32>
    %72 = math.absf %43 : vector<8x1xf32>
    %73 = arith.mulf %72, %36 : vector<8x1xf32>
    %74 = arith.addf %71, %73 : vector<8x1xf32>
    %75 = math.absf %44 : vector<8x1xf32>
    %76 = arith.mulf %75, %37 : vector<8x1xf32>
    %77 = arith.addf %74, %76 : vector<8x1xf32>
    %78 = vector.shape_cast %77 : vector<8x1xf32> to vector<1x8x1xf32>
    %cst_14 = arith.constant dense<0.000000e+00> : vector<1xf32>
    %79 = vector.multi_reduction <add>, %78, %cst_14 [1, 2] : vector<1x8x1xf32> to vector<1xf32>
    %80 = vector.shape_cast %79 : vector<1xf32> to vector<1x1x1xf32>
    %81 = vector.extract %80[0, 0, 0] : f32 from vector<1x1x1xf32>
    %82 = arith.subf %15, %32 : vector<8x1xf32>
    %83 = math.absf %82 : vector<8x1xf32>
    %84 = arith.mulf %83, %38 : vector<8x1xf32>
    %85 = arith.subf %21, %33 : vector<8x1xf32>
    %86 = math.absf %85 : vector<8x1xf32>
    %87 = arith.mulf %86, %39 : vector<8x1xf32>
    %88 = arith.addf %84, %87 : vector<8x1xf32>
    %89 = arith.subf %27, %34 : vector<8x1xf32>
    %90 = math.absf %89 : vector<8x1xf32>
    %91 = arith.mulf %90, %40 : vector<8x1xf32>
    %92 = arith.addf %88, %91 : vector<8x1xf32>
    %93 = vector.shape_cast %92 : vector<8x1xf32> to vector<1x8x1xf32>
    %cst_15 = arith.constant dense<0.000000e+00> : vector<1xf32>
    %94 = vector.multi_reduction <add>, %93, %cst_15 [1, 2] : vector<1x8x1xf32> to vector<1xf32>
    %95 = vector.shape_cast %94 : vector<1xf32> to vector<1x1x1xf32>
    %96 = vector.extract %95[0, 0, 0] : f32 from vector<1x1x1xf32>
    %97 = tpu.iota {dimensions = array<i32: 2>} : vector<1x1x128xi32>
    %c0_i32 = arith.constant 0 : i32
    %98 = vector.broadcast %c0_i32 : i32 to vector<1x1x128xi32>
    %99 = arith.cmpi eq, %97, %98 : vector<1x1x128xi32>
    %cst_16 = arith.constant 0.000000e+00 : f32
    %100 = vector.broadcast %58 : f32 to vector<1x1x128xf32>
    %101 = vector.broadcast %cst_16 : f32 to vector<1x1x128xf32>
    %102 = arith.select %99, %100, %101 : vector<1x1x128xi1>, vector<1x1x128xf32>
    %c1_i32 = arith.constant 1 : i32
    %103 = vector.broadcast %c1_i32 : i32 to vector<1x1x128xi32>
    %104 = arith.cmpi eq, %97, %103 : vector<1x1x128xi32>
    %cst_17 = arith.constant 0.000000e+00 : f32
    %105 = vector.broadcast %69 : f32 to vector<1x1x128xf32>
    %106 = vector.broadcast %cst_17 : f32 to vector<1x1x128xf32>
    %107 = arith.select %104, %105, %106 : vector<1x1x128xi1>, vector<1x1x128xf32>
    %108 = arith.addf %102, %107 : vector<1x1x128xf32>
    %c2_i32 = arith.constant 2 : i32
    %109 = vector.broadcast %c2_i32 : i32 to vector<1x1x128xi32>
    %110 = arith.cmpi eq, %97, %109 : vector<1x1x128xi32>
    %cst_18 = arith.constant 0.000000e+00 : f32
    %111 = vector.broadcast %81 : f32 to vector<1x1x128xf32>
    %112 = vector.broadcast %cst_18 : f32 to vector<1x1x128xf32>
    %113 = arith.select %110, %111, %112 : vector<1x1x128xi1>, vector<1x1x128xf32>
    %114 = arith.addf %108, %113 : vector<1x1x128xf32>
    %c3_i32 = arith.constant 3 : i32
    %115 = vector.broadcast %c3_i32 : i32 to vector<1x1x128xi32>
    %116 = arith.cmpi eq, %97, %115 : vector<1x1x128xi32>
    %cst_19 = arith.constant 0.000000e+00 : f32
    %117 = vector.broadcast %96 : f32 to vector<1x1x128xf32>
    %118 = vector.broadcast %cst_19 : f32 to vector<1x1x128xf32>
    %119 = arith.select %116, %117, %118 : vector<1x1x128xi1>, vector<1x1x128xf32>
    %120 = arith.addf %114, %119 : vector<1x1x128xf32>
    %c0_20 = arith.constant 0 : index
    %c0_21 = arith.constant 0 : index
    %c0_22 = arith.constant 0 : index
    %121 = vector.load %arg4[%c0_20, %c0_21, %c0_22] : memref<1x1x128xf32, #tpu.memory_space<vmem>>, vector<1x1x128xf32>
    tpu.vector_store %arg4[%c0_20, %c0_21, %c0_22], %120 {strides = array<i32>} : memref<1x1x128xf32, #tpu.memory_space<vmem>>, vector<1x1x128xf32>,
    return
  }
  func.func @transform_0(%arg0: i32) -> (i32, i32) {
    %c0_i32 = arith.constant 0 : i32
    %c0_i32_0 = arith.constant 0 : i32
    return %arg0, %c0_i32 : i32, i32
  }
  func.func @transform_1(%arg0: i32) -> (i32, i32) {
    %c0_i32 = arith.constant 0 : i32
    %c0_i32_0 = arith.constant 0 : i32
    %c0_i32_1 = arith.constant 0 : i32
    return %c0_i32, %c0_i32_0 : i32, i32
  }
  func.func @transform_2(%arg0: i32) -> (i32, i32) {
    %c0_i32 = arith.constant 0 : i32
    %c0_i32_0 = arith.constant 0 : i32
    return %arg0, %c0_i32 : i32, i32
  }
  func.func @transform_3(%arg0: i32) -> (i32, i32, i32) {
    %c0_i32 = arith.constant 0 : i32
    %c0_i32_0 = arith.constant 0 : i32
    %c0_i32_1 = arith.constant 0 : i32
    return %arg0, %c0_i32, %c0_i32_0 : i32, i32, i32
  }
}

</mosaic_0001>

<llo_original>
// kernel: tpu_custom_call.1
$region0: #{tpu_custom_call.1}
  #allocation0 [shape = 'u32[]', space=smem, size = 0x4, offset = 0x4, fixed_abs, tag = 'smem constant byte address 0x4 - core index']
  #allocation1 [shape = 'u32[144,128]{1,0:T(1,128)}', space=vmem, size = 0x12000, scoped, tag = 'internal scratch']
  %s0 = inlined_call_operand.hbm [shape: f32[8,256], index: 0, kind: input, shape index: {}]
  %s1 = inlined_call_operand.hbm [shape: f32[4,256], index: 1, kind: input, shape index: {}]
  %s2 = inlined_call_operand.hbm [shape: f32[8,16], index: 2, kind: input, shape index: {}]
  %s3 = inlined_call_operand.hbm [shape: f32[1,1,128], index: 3, kind: output, shape index: {}]
  %s4 = sld [smem:[#allocation0]]
  $region34: #{tpu_custom_call.1} parent=0
    _
  %s6 = ssub.s32 1, %s4
  %s7 = scalar_select 0, %s6, %s4
  $region1: #{tpu_custom_call.1} parent=0
    #allocation2 [shape = 'u8[8192]{0}', space=vmem, size = 0x2000, scoped, tag = 'input window, operand 0, single buffered']
    #allocation3 [shape = 's32[1]{0}', space=sflag, size = 0x4, scoped, tag = 'scoped memory for tpu_custom_call.1']
    #allocation4 [shape = 's32[1]{0}', space=sflag, size = 0x4, scoped, tag = 'scoped memory for tpu_custom_call.1']
    #allocation5 [shape = 'u8[4096]{0}', space=vmem, size = 0x1000, scoped, tag = 'input window, operand 1, single buffered']
    #allocation6 [shape = 's32[1]{0}', space=sflag, size = 0x4, scoped, tag = 'scoped memory for tpu_custom_call.1']
    #allocation7 [shape = 'u8[4096]{0}', space=vmem, size = 0x1000, scoped, tag = 'input window, operand 2, single buffered']
    #allocation8 [shape = 'u8[512]{0}', space=vmem, size = 0x400, scoped, tag = 'output window, operand 0, single buffered']
    %8 = vsyncpa [#allocation3], 0
    %9 = vsyncpa [#allocation6], 0
    %10 = vsyncpa [#allocation4], 0
    // Predicated region
    $region2: #{tpu_custom_call.1} parent=1 // pred_check
      _
    $region3: #{tpu_custom_call.1} parent=1 // pred_check_branch
      %12 = sbr.rel (0) target = $region5
    $region4: #{tpu_custom_call.1} parent=1 // pred_region
      %s14 = ssub.s32 256, 256
      %15 = vsyncadd [#allocation3], %s14
      %s17 = sshll.u32 [#allocation2], 4
      %s18 = int_to_ptr.vmem [resolvable:$true] %s17
      %20 = dma.hbm_to_vmem [thread:$0]  %s0, 256, %s18, [#allocation3]
    $region5: #{tpu_custom_call.1} parent=1 // pred_fallthru
      _
    // Predicated region
    $region6: #{tpu_custom_call.1} parent=1 // pred_check
      _
    $region7: #{tpu_custom_call.1} parent=1 // pred_check_branch
      %22 = sbr.rel (0) target = $region9
    $region8: #{tpu_custom_call.1} parent=1 // pred_region
      %s24 = ssub.s32 128, 128
      %25 = vsyncadd [#allocation6], %s24
      %s27 = sshll.u32 [#allocation5], 4
      %s28 = int_to_ptr.vmem [resolvable:$true] %s27
      %30 = dma.hbm_to_vmem [thread:$0]  %s1, 128, %s28, [#allocation6]
    $region9: #{tpu_custom_call.1} parent=1 // pred_fallthru
      _
    // Predicated region
    $region10: #{tpu_custom_call.1} parent=1 // pred_check
      _
    $region11: #{tpu_custom_call.1} parent=1 // pred_check_branch
      %32 = sbr.rel (0) target = $region13
    $region12: #{tpu_custom_call.1} parent=1 // pred_region
      %s34 = ssub.s32 128, 128
      %35 = vsyncadd [#allocation6], %s34
      %s37 = sshll.u32 [#allocation7], 4
      %s38 = int_to_ptr.vmem [resolvable:$true] %s37
      %40 = dma.hbm_to_vmem [thread:$0]  %s2, 128, %s38, [#allocation6]
    $region13: #{tpu_custom_call.1} parent=1 // pred_fallthru
      _
    // Predicated region
    $region14: #{tpu_custom_call.1} parent=1 // pred_check
      _
    $region15: #{tpu_custom_call.1} parent=1 // pred_check_branch
      %42 = sbr.rel (0) target = $region17
    $region16: #{tpu_custom_call.1} parent=1 // pred_region
      %43 = dma.done [#allocation3], 256
    $region17: #{tpu_custom_call.1} parent=1 // pred_fallthru
      _
    // Predicated region
    $region18: #{tpu_custom_call.1} parent=1 // pred_check
      _
    $region19: #{tpu_custom_call.1} parent=1 // pred_check_branch
      %45 = sbr.rel (0) target = $region21
    $region20: #{tpu_custom_call.1} parent=1 // pred_region
      %46 = dma.done [#allocation6], 128
    $region21: #{tpu_custom_call.1} parent=1 // pred_fallthru
      _
    // Predicated region
    $region22: #{tpu_custom_call.1} parent=1 // pred_check
      _
    $region23: #{tpu_custom_call.1} parent=1 // pred_check_branch
      %48 = sbr.rel (0) target = $region25
    $region24: #{tpu_custom_call.1} parent=1 // pred_region
      %49 = dma.done [#allocation6], 128
    $region25: #{tpu_custom_call.1} parent=1 // pred_fallthru
      _
    %v50 = vld [vmem:[#allocation2] sm:$0xff]
    %v51 = vld [vmem:[#allocation2 + $0x8] sm:$0xff]
    %v52 = vmax.f32 %v50, %v51
    %53 = vmax.xlane.f32.xlu0 %v52
    %v54 = vpop.xlane.xlu0 %53
    %v55 = vsub.f32 %v50, %v54
    %v56 = vsub.f32 %v51, %v54
    %v57 = vmul.f32 %v55, 1.442695
    %v58 = vpow.pop %v57
    %v59 = vmul.f32 %v56, 1.442695
    %v60 = vpow.pop %v59
    %v61 = vld [vmem:[#allocation5] sm:$0xff]
    %v63 = vcombine.high %v61, %v61
    %65 = vmatprep.subr.mxu0 %v63
    %66 = vmatpush1.xpose.msra.mxu0 %v61
    %67 = vmatprep.subr.mxu0 0.0
    %68 = vmatpush1.xpose.msra.mxu0 0.0
    %69 = vmatprep.subr.mxu0 0.0
    %70 = vmatpush1.xpose.msra.mxu0 0.0
    %71 = vmatprep.subr.mxu0 0.0
    %72 = vmatpush1.xpose.msra.mxu0 0.0
    %73 = vmatprep.subr.mxu0 0.0
    %74 = vmatpush1.xpose.msra.mxu0 0.0
    %75 = vmatprep.subr.mxu0 0.0
    %76 = vmatpush1.xpose.msra.mxu0 0.0
    %77 = vmatprep.subr.mxu0 0.0
    %78 = vmatpush1.xpose.msra.mxu0 0.0
    %79 = vmatprep.subr.mxu0 0.0
    %80 = vmatpush1.xpose.msra.mxu0 0.0
    %81 = vmatprep.subr.mxu0 0.0
    %82 = vmatpush1.xpose.msra.mxu0 0.0
    %83 = vmatprep.subr.mxu0 0.0
    %84 = vmatpush1.xpose.msra.mxu0 0.0
    %85 = vmatprep.subr.mxu0 0.0
    %86 = vmatpush1.xpose.msra.mxu0 0.0
    %87 = vmatprep.subr.mxu0 0.0
    %88 = vmatpush1.xpose.msra.mxu0 0.0
    %89 = vmatprep.subr.mxu0 0.0
    %90 = vmatpush1.xpose.msra.mxu0 0.0
    %91 = vmatprep.subr.mxu0 0.0
    %92 = vmatpush1.xpose.msra.mxu0 0.0
    %93 = vmatprep.subr.mxu0 0.0
    %94 = vmatpush1.xpose.msra.mxu0 0.0
    %95 = vmatprep.subr.mxu0 0.0
    %96 = vmatpush1.xpose.msra.mxu0 0.0
    %97 = vmatprep.subr.mxu0 0.0
    %98 = vmatpush1.xpose.msra.mxu0 0.0
    %99 = vmatprep.subr.mxu0 0.0
    %100 = vmatpush1.xpose.msra.mxu0 0.0
    %101 = vmatprep.subr.mxu0 0.0
    %102 = vmatpush1.xpose.msra.mxu0 0.0
    %103 = vmatprep.subr.mxu0 0.0
    %104 = vmatpush1.xpose.msra.mxu0 0.0
    %105 = vmatprep.subr.mxu0 0.0
    %106 = vmatpush1.xpose.msra.mxu0 0.0
    %107 = vmatprep.subr.mxu0 0.0
    %108 = vmatpush1.xpose.msra.mxu0 0.0
    %109 = vmatprep.subr.mxu0 0.0
    %110 = vmatpush1.xpose.msra.mxu0 0.0
    %111 = vmatprep.subr.mxu0 0.0
    %112 = vmatpush1.xpose.msra.mxu0 0.0
    %113 = vmatprep.subr.mxu0 0.0
    %114 = vmatpush1.xpose.msra.mxu0 0.0
    %115 = vmatprep.subr.mxu0 0.0
    %116 = vmatpush1.xpose.msra.mxu0 0.0
    %117 = vmatprep.subr.mxu0 0.0
    %118 = vmatpush1.xpose.msra.mxu0 0.0
    %119 = vmatprep.subr.mxu0 0.0
    %120 = vmatpush1.xpose.msra.mxu0 0.0
    %121 = vmatprep.subr.mxu0 0.0
    %122 = vmatpush1.xpose.msra.mxu0 0.0
    %123 = vmatprep.subr.mxu0 0.0
    %124 = vmatpush1.xpose.msra.mxu0 0.0
    %125 = vmatprep.subr.mxu0 0.0
    %126 = vmatpush1.xpose.msra.mxu0 0.0
    %127 = vmatprep.subr.mxu0 0.0
    %128 = vmatpush1.xpose.msra.mxu0 0.0
    %129 = vmatprep.mubr.f32.mxu0 %v60
    %130 = vmatmul.mubr.f32.gmra.mrb[0].mxu0 %v58
    %v131 = vpop.f32.mrb[0].mxu0
    %v132 = vadd.f32 0.0, %v131
    %v133 = vpop.f32.mrb[0].mxu0
    %134 = vdwg.mxu0
    %v135 = vrcp.pop %v132
    %137 = vrot.lane.b32.xlu0 %v135, 125
    %v138 = vpop.permute.xlu0 %137
    %v140 = vmul.f32 %v132, %v138
    %v141 = vmul.f32 %v140, 0.125
    %v142 = vsub.f32 %v141, 0.5
    %143 = vrot.lane.b32.xlu0 %v135, 126
    %v144 = vpop.permute.xlu0 %143
    %v146 = vmul.f32 %v132, %v144
    %v147 = vmul.f32 %v146, 0.125
    %v148 = vsub.f32 %v147, 0.5
    %149 = vrot.lane.b32.xlu0 %v135, 127
    %v150 = vpop.permute.xlu0 %149
    %v152 = vmul.f32 %v132, %v150
    %v153 = vmul.f32 %v152, 0.25
    %v154 = vsub.f32 %v153, 0.5
    %v155 = vld [vmem:[#allocation7] sm:$0xff]
    %v156 = vsub.f32 %v142, %v155
    %v157 = vsub.f32 %v148, %v155
    %v158 = vsub.f32 %v154, %v155
    %160 = vrot.lane.b32.xlu0 %v155, 3
    %v161 = vpop.permute.xlu0 %160
    %v163 = vsub.f32 %v155, %v161
    %v164 = vmul.f32 %v156, %v156
    %v165 = vmul.f32 %v157, %v157
    %167 = vrot.lane.b32.xlu0 %v165, 127
    %v168 = vpop.permute.xlu0 %167
    %v170 = vadd.f32 %v164, %v168
    %v171 = vmul.f32 %v158, %v158
    %173 = vrot.lane.b32.xlu0 %v171, 126
    %v174 = vpop.permute.xlu0 %173
    %v176 = vadd.f32 %v170, %v174
    %v177 = vrsqrt.pop %v176
    %v178 = vmul.f32 %v176, %v177
    %vm179 = vcmp.eq.f32.partialorder %v176, inf
    %v180 = vsel %vm179, %v176, %v178
    %vm181 = vcmp.eq.f32.partialorder %v176, 0.0
    %v182 = vand.u32 %v176, 2147483648
    %v183 = vsel %vm181, %v182, %v180
    %184 = vrot.lane.b32.xlu0 %v155, 116
    %v185 = vpop.permute.xlu0 %184
    %v187 = vmul.f32 %v183, %v185
    %vm188 = vcmask 7168
    %v189 = vsel %vm188, %v187, 0.0
    %190 = vadd.xlane.f32.xlu0 %v189
    %v191 = vpop.xlane.xlu0 %190
    %v192 = vrot.slane %v191, 4
    %v193 = vadd.f32 %v191, %v192
    %v194 = vrot.slane %v193, 2
    %v195 = vadd.f32 %v193, %v194
    %v196 = vrot.slane %v195, 1
    %v197 = vadd.f32 %v195, %v196
    %s198 = vtos %v197
    %v199 = vmul.f32 %v163, %v163
    %201 = vrot.lane.b32.xlu0 %v199, 127
    %v202 = vpop.permute.xlu0 %201
    %v204 = vadd.f32 %v199, %v202
    %205 = vrot.lane.b32.xlu0 %v199, 126
    %v206 = vpop.permute.xlu0 %205
    %v208 = vadd.f32 %v204, %v206
    %v209 = vrsqrt.pop %v208
    %v210 = vmul.f32 %v208, %v209
    %vm211 = vcmp.eq.f32.partialorder %v208, inf
    %v212 = vsel %vm211, %v208, %v210
    %vm213 = vcmp.eq.f32.partialorder %v208, 0.0
    %v214 = vand.u32 %v208, 2147483648
    %v215 = vsel %vm213, %v214, %v212
    %216 = vrot.lane.b32.xlu0 %v155, 119
    %v217 = vpop.permute.xlu0 %216
    %v219 = vmul.f32 %v215, %v217
    %221 = vrot.lane.b32.xlu0 %v219, 125
    %v222 = vpop.permute.xlu0 %221
    %v224 = vsel %vm188, %v222, 0.0
    %225 = vadd.xlane.f32.xlu0 %v224
    %v226 = vpop.xlane.xlu0 %225
    %v227 = vrot.slane %v226, 4
    %v228 = vadd.f32 %v226, %v227
    %v229 = vrot.slane %v228, 2
    %v230 = vadd.f32 %v228, %v229
    %v231 = vrot.slane %v230, 1
    %v232 = vadd.f32 %v230, %v231
    %s233 = vtos %v232
    %v234 = vand.u32 2147483647, %v156
    %235 = vrot.lane.b32.xlu0 %v155, 122
    %v236 = vpop.permute.xlu0 %235
    %v238 = vmul.f32 %v234, %v236
    %v239 = vand.u32 2147483647, %v157
    %v240 = vmul.f32 %v239, %v236
    %242 = vrot.lane.b32.xlu0 %v240, 127
    %v243 = vpop.permute.xlu0 %242
    %v245 = vadd.f32 %v238, %v243
    %v246 = vand.u32 2147483647, %v158
    %v247 = vmul.f32 %v246, %v236
    %249 = vrot.lane.b32.xlu0 %v247, 126
    %v250 = vpop.permute.xlu0 %249
    %v252 = vadd.f32 %v245, %v250
    %v253 = vsel %vm188, %v252, 0.0
    %254 = vadd.xlane.f32.xlu0 %v253
    %v255 = vpop.xlane.xlu0 %254
    %v256 = vrot.slane %v255, 4
    %v257 = vadd.f32 %v255, %v256
    %v258 = vrot.slane %v257, 2
    %v259 = vadd.f32 %v257, %v258
    %v260 = vrot.slane %v259, 1
    %v261 = vadd.f32 %v259, %v260
    %s262 = vtos %v261
    %263 = vrot.lane.b32.xlu0 %v155, 125
    %v264 = vpop.permute.xlu0 %263
    %v266 = vsub.f32 %v142, %v264
    %v267 = vand.u32 2147483647, %v266
    %v268 = vmul.f32 %v267, %v217
    %v269 = vsub.f32 %v148, %v264
    %v270 = vand.u32 2147483647, %v269
    %v271 = vmul.f32 %v270, %v217
    %273 = vrot.lane.b32.xlu0 %v271, 127
    %v274 = vpop.permute.xlu0 %273
    %v276 = vadd.f32 %v268, %v274
    %v277 = vsub.f32 %v154, %v264
    %v278 = vand.u32 2147483647, %v277
    %v279 = vmul.f32 %v278, %v217
    %281 = vrot.lane.b32.xlu0 %v279, 126
    %v282 = vpop.permute.xlu0 %281
    %v284 = vadd.f32 %v276, %v282
    %v285 = vsel %vm188, %v284, 0.0
    %286 = vadd.xlane.f32.xlu0 %v285
    %v287 = vpop.xlane.xlu0 %286
    %v288 = vrot.slane %v287, 4
    %v289 = vadd.f32 %v287, %v288
    %v290 = vrot.slane %v289, 2
    %v291 = vadd.f32 %v289, %v290
    %v292 = vrot.slane %v291, 1
    %v293 = vadd.f32 %v291, %v292
    %s294 = vtos %v293
    %v295 = vlaneseq
    %v296 = vand.u32 %v295, 127
    %vm297 = vcmp.eq.s32.totalorder %v296, 0
    %v298 = vstv %s198
    %v299 = vsel %vm297, %v298, 0.0
    %vm300 = vcmp.eq.s32.totalorder %v296, 1
    %v301 = vstv %s233
    %v302 = vsel %vm300, %v301, 0.0
    %v303 = vadd.f32 %v299, %v302
    %vm304 = vcmp.eq.s32.totalorder %v296, 2
    %v305 = vstv %s262
    %v306 = vsel %vm304, %v305, 0.0
    %v307 = vadd.f32 %v303, %v306
    %vm308 = vcmp.eq.s32.totalorder %v296, 3
    %v309 = vstv %s294
    %v310 = vsel %vm308, %v309, 0.0
    %v311 = vadd.f32 %v307, %v310
    %312 = vst [vmem:[#allocation8] sm:$0x1] %v311
    // Predicated region
    $region26: #{tpu_custom_call.1} parent=1 // pred_check
      _
    $region27: #{tpu_custom_call.1} parent=1 // pred_check_branch
      %314 = sbr.rel (0) target = $region29
    $region28: #{tpu_custom_call.1} parent=1 // pred_region
      %s316 = ssub.s32 16, 16
      %317 = vsyncadd [#allocation4], %s316
      %s319 = sshll.u32 [#allocation8], 4
      %s320 = int_to_ptr.vmem [resolvable:$true] %s319
      %322 = dma.vmem_to_hbm [thread:$0]  %s320, 16, %s3, [#allocation4]
    $region29: #{tpu_custom_call.1} parent=1 // pred_fallthru
      _
    // Predicated region
    $region30: #{tpu_custom_call.1} parent=1 // pred_check
      _
    $region31: #{tpu_custom_call.1} parent=1 // pred_check_branch
      %324 = sbr.rel (0) target = $region33
    $region32: #{tpu_custom_call.1} parent=1 // pred_region
      %325 = dma.done [#allocation4], 16
    $region33: #{tpu_custom_call.1} parent=1 // pred_fallthru
      _
    %326 = vsyncpa [#allocation3], 1
    %327 = vsyncpa [#allocation6], 1
    %328 = vsyncpa [#allocation4], 1

// kernel: tpu_custom_call.1
$region0: #{tpu_custom_call.1}
  #allocation0 [shape = 'u32[]', space=smem, size = 0x4, offset = 0x4, fixed_abs, tag = 'smem constant byte address 0x4 - core index']
  #allocation1 [shape = 'u32[144,128]{1,0:T(1,128)}', space=vmem, size = 0x12000, scoped, tag = 'internal scratch']
  %s0 = inlined_call_operand.hbm [shape: f32[8,256], index: 0, kind: input, shape index: {}]
  %s1 = inlined_call_operand.hbm [shape: f32[4,256], index: 1, kind: input, shape index: {}]
  %s2 = inlined_call_operand.hbm [shape: f32[8,16], index: 2, kind: input, shape index: {}]
  %s3 = inlined_call_operand.hbm [shape: f32[1,1,128], index: 3, kind: output, shape index: {}]
  %s4 = sld [smem:[#allocation0]]
  $region34: #{tpu_custom_call.1} parent=0
    _
  %s6 = ssub.s32 1, %s4
  %s7 = scalar_select 0, %s6, %s4
  $region1: #{tpu_custom_call.1} parent=0
    #allocation2 [shape = 'u8[8192]{0}', space=vmem, size = 0x2000, scoped, tag = 'input window, operand 0, single buffered']
    #allocation3 [shape = 's32[1]{0}', space=sflag, size = 0x4, scoped, tag = 'scoped memory for tpu_custom_call.1']
    #allocation4 [shape = 's32[1]{0}', space=sflag, size = 0x4, scoped, tag = 'scoped memory for tpu_custom_call.1']
    #allocation5 [shape = 'u8[4096]{0}', space=vmem, size = 0x1000, scoped, tag = 'input window, operand 1, single buffered']
    #allocation6 [shape = 's32[1]{0}', space=sflag, size = 0x4, scoped, tag = 'scoped memory for tpu_custom_call.1']
    #allocation7 [shape = 'u8[4096]{0}', space=vmem, size = 0x1000, scoped, tag = 'input window, operand 2, single buffered']
    #allocation8 [shape = 'u8[512]{0}', space=vmem, size = 0x400, scoped, tag = 'output window, operand 0, single buffered']
    %8 = vsyncpa [#allocation3], 0
    %9 = vsyncpa [#allocation6], 0
    %10 = vsyncpa [#allocation4], 0
    // Predicated region
    $region2: #{tpu_custom_call.1} parent=1 // pred_check
      _
    $region3: #{tpu_custom_call.1} parent=1 // pred_check_branch
      %12 = sbr.rel (0) target = $region5
    $region4: #{tpu_custom_call.1} parent=1 // pred_region
      %s14 = ssub.s32 256, 256
      %15 = vsyncadd [#allocation3], %s14
      %s17 = sshll.u32 [#allocation2], 4
      %s18 = int_to_ptr.vmem [resolvable:$true] %s17
      %20 = dma.hbm_to_vmem [thread:$0]  %s0, 256, %s18, [#allocation3]
    $region5: #{tpu_custom_call.1} parent=1 // pred_fallthru
      _
    // Predicated region
    $region6: #{tpu_custom_call.1} parent=1 // pred_check
      _
    $region7: #{tpu_custom_call.1} parent=1 // pred_check_branch
      %22 = sbr.rel (0) target = $region9
    $region8: #{tpu_custom_call.1} parent=1 // pred_region
      %s24 = ssub.s32 128, 128
      %25 = vsyncadd [#allocation6], %s24
      %s27 = sshll.u32 [#allocation5], 4
      %s28 = int_to_ptr.vmem [resolvable:$true] %s27
      %30 = dma.hbm_to_vmem [thread:$0]  %s1, 128, %s28, [#allocation6]
    $region9: #{tpu_custom_call.1} parent=1 // pred_fallthru
      _
    // Predicated region
    $region10: #{tpu_custom_call.1} parent=1 // pred_check
      _
    $region11: #{tpu_custom_call.1} parent=1 // pred_check_branch
      %32 = sbr.rel (0) target = $region13
    $region12: #{tpu_custom_call.1} parent=1 // pred_region
      %s34 = ssub.s32 128, 128
      %35 = vsyncadd [#allocation6], %s34
      %s37 = sshll.u32 [#allocation7], 4
      %s38 = int_to_ptr.vmem [resolvable:$true] %s37
      %40 = dma.hbm_to_vmem [thread:$0]  %s2, 128, %s38, [#allocation6]
    $region13: #{tpu_custom_call.1} parent=1 // pred_fallthru
      _
    // Predicated region
    $region14: #{tpu_custom_call.1} parent=1 // pred_check
      _
    $region15: #{tpu_custom_call.1} parent=1 // pred_check_branch
      %42 = sbr.rel (0) target = $region17
    $region16: #{tpu_custom_call.1} parent=1 // pred_region
      %43 = dma.done [#allocation3], 256
    $region17: #{tpu_custom_call.1} parent=1 // pred_fallthru
      _
    // Predicated region
    $region18: #{tpu_custom_call.1} parent=1 // pred_check
      _
    $region19: #{tpu_custom_call.1} parent=1 // pred_check_branch
      %45 = sbr.rel (0) target = $region21
    $region20: #{tpu_custom_call.1} parent=1 // pred_region
      %46 = dma.done [#allocation6], 128
    $region21: #{tpu_custom_call.1} parent=1 // pred_fallthru
      _
    // Predicated region
    $region22: #{tpu_custom_call.1} parent=1 // pred_check
      _
    $region23: #{tpu_custom_call.1} parent=1 // pred_check_branch
      %48 = sbr.rel (0) target = $region25
    $region24: #{tpu_custom_call.1} parent=1 // pred_region
      %49 = dma.done [#allocation6], 128
    $region25: #{tpu_custom_call.1} parent=1 // pred_fallthru
      _
    %v50 = vld [vmem:[#allocation2] sm:$0xff]
    %v51 = vld [vmem:[#allocation2 + $0x8] sm:$0xff]
    %v52 = vmax.f32 %v50, %v51
    %53 = vmax.xlane.f32.xlu0 %v52
    %v54 = vpop.xlane.xlu0 %53
    %v55 = vsub.f32 %v50, %v54
    %v56 = vsub.f32 %v51, %v54
    %v57 = vmul.f32 %v55, 1.442695
    %v58 = vpow.pop %v57
    %v59 = vmul.f32 %v56, 1.442695
    %v60 = vpow.pop %v59
    %v61 = vld [vmem:[#allocation5] sm:$0xff]
    %v63 = vcombine.high %v61, %v61
    %65 = vmatprep.subr.mxu0 %v63
    %66 = vmatpush1.xpose.msra.mxu0 %v61
    %67 = vmatprep.subr.mxu0 0.0
    %68 = vmatpush1.xpose.msra.mxu0 0.0
    %69 = vmatprep.subr.mxu0 0.0
    %70 = vmatpush1.xpose.msra.mxu0 0.0
    %71 = vmatprep.subr.mxu0 0.0
    %72 = vmatpush1.xpose.msra.mxu0 0.0
    %73 = vmatprep.subr.mxu0 0.0
    %74 = vmatpush1.xpose.msra.mxu0 0.0
    %75 = vmatprep.subr.mxu0 0.0
    %76 = vmatpush1.xpose.msra.mxu0 0.0
    %77 = vmatprep.subr.mxu0 0.0
    %78 = vmatpush1.xpose.msra.mxu0 0.0
    %79 = vmatprep.subr.mxu0 0.0
    %80 = vmatpush1.xpose.msra.mxu0 0.0
    %81 = vmatprep.subr.mxu0 0.0
    %82 = vmatpush1.xpose.msra.mxu0 0.0
    %83 = vmatprep.subr.mxu0 0.0
    %84 = vmatpush1.xpose.msra.mxu0 0.0
    %85 = vmatprep.subr.mxu0 0.0
    %86 = vmatpush1.xpose.msra.mxu0 0.0
    %87 = vmatprep.subr.mxu0 0.0
    %88 = vmatpush1.xpose.msra.mxu0 0.0
    %89 = vmatprep.subr.mxu0 0.0
    %90 = vmatpush1.xpose.msra.mxu0 0.0
    %91 = vmatprep.subr.mxu0 0.0
    %92 = vmatpush1.xpose.msra.mxu0 0.0
    %93 = vmatprep.subr.mxu0 0.0
    %94 = vmatpush1.xpose.msra.mxu0 0.0
    %95 = vmatprep.subr.mxu0 0.0
    %96 = vmatpush1.xpose.msra.mxu0 0.0
    %97 = vmatprep.subr.mxu0 0.0
    %98 = vmatpush1.xpose.msra.mxu0 0.0
    %99 = vmatprep.subr.mxu0 0.0
    %100 = vmatpush1.xpose.msra.mxu0 0.0
    %101 = vmatprep.subr.mxu0 0.0
    %102 = vmatpush1.xpose.msra.mxu0 0.0
    %103 = vmatprep.subr.mxu0 0.0
    %104 = vmatpush1.xpose.msra.mxu0 0.0
    %105 = vmatprep.subr.mxu0 0.0
    %106 = vmatpush1.xpose.msra.mxu0 0.0
    %107 = vmatprep.subr.mxu0 0.0
    %108 = vmatpush1.xpose.msra.mxu0 0.0
    %109 = vmatprep.subr.mxu0 0.0
    %110 = vmatpush1.xpose.msra.mxu0 0.0
    %111 = vmatprep.subr.mxu0 0.0
    %112 = vmatpush1.xpose.msra.mxu0 0.0
    %113 = vmatprep.subr.mxu0 0.0
    %114 = vmatpush1.xpose.msra.mxu0 0.0
    %115 = vmatprep.subr.mxu0 0.0
    %116 = vmatpush1.xpose.msra.mxu0 0.0
    %117 = vmatprep.subr.mxu0 0.0
    %118 = vmatpush1.xpose.msra.mxu0 0.0
    %119 = vmatprep.subr.mxu0 0.0
    %120 = vmatpush1.xpose.msra.mxu0 0.0
    %121 = vmatprep.subr.mxu0 0.0
    %122 = vmatpush1.xpose.msra.mxu0 0.0
    %123 = vmatprep.subr.mxu0 0.0
    %124 = vmatpush1.xpose.msra.mxu0 0.0
    %125 = vmatprep.subr.mxu0 0.0
    %126 = vmatpush1.xpose.msra.mxu0 0.0
    %127 = vmatprep.subr.mxu0 0.0
    %128 = vmatpush1.xpose.msra.mxu0 0.0
    %129 = vmatprep.mubr.f32.mxu0 %v60
    %130 = vmatmul.mubr.f32.gmra.mrb[0].mxu0 %v58
    %v131 = vpop.f32.mrb[0].mxu0
    %v132 = vadd.f32 0.0, %v131
    %v133 = vpop.f32.mrb[0].mxu0
    %134 = vdwg.mxu0
    %v135 = vrcp.pop %v132
    %137 = vrot.lane.b32.xlu0 %v135, 125
    %v138 = vpop.permute.xlu0 %137
    %v140 = vmul.f32 %v132, %v138
    %v141 = vmul.f32 %v140, 0.125
    %v142 = vsub.f32 %v141, 0.5
    %143 = vrot.lane.b32.xlu0 %v135, 126
    %v144 = vpop.permute.xlu0 %143
    %v146 = vmul.f32 %v132, %v144
    %v147 = vmul.f32 %v146, 0.125
    %v148 = vsub.f32 %v147, 0.5
    %149 = vrot.lane.b32.xlu0 %v135, 127
    %v150 = vpop.permute.xlu0 %149
    %v152 = vmul.f32 %v132, %v150
    %v153 = vmul.f32 %v152, 0.25
    %v154 = vsub.f32 %v153, 0.5
    %v155 = vld [vmem:[#allocation7] sm:$0xff]
    %v156 = vsub.f32 %v142, %v155
    %v157 = vsub.f32 %v148, %v155
    %v158 = vsub.f32 %v154, %v155
    %160 = vrot.lane.b32.xlu0 %v155, 3
    %v161 = vpop.permute.xlu0 %160
    %v163 = vsub.f32 %v155, %v161
    %v164 = vmul.f32 %v156, %v156
    %v165 = vmul.f32 %v157, %v157
    %167 = vrot.lane.b32.xlu0 %v165, 127
    %v168 = vpop.permute.xlu0 %167
    %v170 = vadd.f32 %v164, %v168
    %v171 = vmul.f32 %v158, %v158
    %173 = vrot.lane.b32.xlu0 %v171, 126
    %v174 = vpop.permute.xlu0 %173
    %v176 = vadd.f32 %v170, %v174
    %v177 = vrsqrt.pop %v176
    %v178 = vmul.f32 %v176, %v177
    %vm179 = vcmp.eq.f32.partialorder %v176, inf
    %v180 = vsel %vm179, %v176, %v178
    %vm181 = vcmp.eq.f32.partialorder %v176, 0.0
    %v182 = vand.u32 %v176, 2147483648
    %v183 = vsel %vm181, %v182, %v180
    %184 = vrot.lane.b32.xlu0 %v155, 116
    %v185 = vpop.permute.xlu0 %184
    %v187 = vmul.f32 %v183, %v185
    %vm188 = vcmask 7168
    %v189 = vsel %vm188, %v187, 0.0
    %190 = vadd.xlane.f32.xlu0 %v189
    %v191 = vpop.xlane.xlu0 %190
    %v192 = vrot.slane %v191, 4
    %v193 = vadd.f32 %v191, %v192
    %v194 = vrot.slane %v193, 2
    %v195 = vadd.f32 %v193, %v194
    %v196 = vrot.slane %v195, 1
    %v197 = vadd.f32 %v195, %v196
    %s198 = vtos %v197
    %v199 = vmul.f32 %v163, %v163
    %201 = vrot.lane.b32.xlu0 %v199, 127
    %v202 = vpop.permute.xlu0 %201
    %v204 = vadd.f32 %v199, %v202
    %205 = vrot.lane.b32.xlu0 %v199, 126
    %v206 = vpop.permute.xlu0 %205
    %v208 = vadd.f32 %v204, %v206
    %v209 = vrsqrt.pop %v208
    %v210 = vmul.f32 %v208, %v209
    %vm211 = vcmp.eq.f32.partialorder %v208, inf
    %v212 = vsel %vm211, %v208, %v210
    %vm213 = vcmp.eq.f32.partialorder %v208, 0.0
    %v214 = vand.u32 %v208, 2147483648
    %v215 = vsel %vm213, %v214, %v212
    %216 = vrot.lane.b32.xlu0 %v155, 119
    %v217 = vpop.permute.xlu0 %216
    %v219 = vmul.f32 %v215, %v217
    %221 = vrot.lane.b32.xlu0 %v219, 125
    %v222 = vpop.permute.xlu0 %221
    %v224 = vsel %vm188, %v222, 0.0
    %225 = vadd.xlane.f32.xlu0 %v224
    %v226 = vpop.xlane.xlu0 %225
    %v227 = vrot.slane %v226, 4
    %v228 = vadd.f32 %v226, %v227
    %v229 = vrot.slane %v228, 2
    %v230 = vadd.f32 %v228, %v229
    %v231 = vrot.slane %v230, 1
    %v232 = vadd.f32 %v230, %v231
    %s233 = vtos %v232
    %v234 = vand.u32 2147483647, %v156
    %235 = vrot.lane.b32.xlu0 %v155, 122
    %v236 = vpop.permute.xlu0 %235
    %v238 = vmul.f32 %v234, %v236
    %v239 = vand.u32 2147483647, %v157
    %v240 = vmul.f32 %v239, %v236
    %242 = vrot.lane.b32.xlu0 %v240, 127
    %v243 = vpop.permute.xlu0 %242
    %v245 = vadd.f32 %v238, %v243
    %v246 = vand.u32 2147483647, %v158
    %v247 = vmul.f32 %v246, %v236
    %249 = vrot.lane.b32.xlu0 %v247, 126
    %v250 = vpop.permute.xlu0 %249
    %v252 = vadd.f32 %v245, %v250
    %v253 = vsel %vm188, %v252, 0.0
    %254 = vadd.xlane.f32.xlu0 %v253
    %v255 = vpop.xlane.xlu0 %254
    %v256 = vrot.slane %v255, 4
    %v257 = vadd.f32 %v255, %v256
    %v258 = vrot.slane %v257, 2
    %v259 = vadd.f32 %v257, %v258
    %v260 = vrot.slane %v259, 1
    %v261 = vadd.f32 %v259, %v260
    %s262 = vtos %v261
    %263 = vrot.lane.b32.xlu0 %v155, 125
    %v264 = vpop.permute.xlu0 %263
    %v266 = vsub.f32 %v142, %v264
    %v267 = vand.u32 2147483647, %v266
    %v268 = vmul.f32 %v267, %v217
    %v269 = vsub.f32 %v148, %v264
    %v270 = vand.u32 2147483647, %v269
    %v271 = vmul.f32 %v270, %v217
    %273 = vrot.lane.b32.xlu0 %v271, 127
    %v274 = vpop.permute.xlu0 %273
    %v276 = vadd.f32 %v268, %v274
    %v277 = vsub.f32 %v154, %v264
    %v278 = vand.u32 2147483647, %v277
    %v279 = vmul.f32 %v278, %v217
    %281 = vrot.lane.b32.xlu0 %v279, 126
    %v282 = vpop.permute.xlu0 %281
    %v284 = vadd.f32 %v276, %v282
    %v285 = vsel %vm188, %v284, 0.0
    %286 = vadd.xlane.f32.xlu0 %v285
    %v287 = vpop.xlane.xlu0 %286
    %v288 = vrot.slane %v287, 4
    %v289 = vadd.f32 %v287, %v288
    %v290 = vrot.slane %v289, 2
    %v291 = vadd.f32 %v289, %v290
    %v292 = vrot.slane %v291, 1
    %v293 = vadd.f32 %v291, %v292
    %s294 = vtos %v293
    %v295 = vlaneseq
    %v296 = vand.u32 %v295, 127
    %vm297 = vcmp.eq.s32.totalorder %v296, 0
    %v298 = vstv %s198
    %v299 = vsel %vm297, %v298, 0.0
    %vm300 = vcmp.eq.s32.totalorder %v296, 1
    %v301 = vstv %s233
    %v302 = vsel %vm300, %v301, 0.0
    %v303 = vadd.f32 %v299, %v302
    %vm304 = vcmp.eq.s32.totalorder %v296, 2
    %v305 = vstv %s262
    %v306 = vsel %vm304, %v305, 0.0
    %v307 = vadd.f32 %v303, %v306
    %vm308 = vcmp.eq.s32.totalorder %v296, 3
    %v309 = vstv %s294
    %v310 = vsel %vm308, %v309, 0.0
    %v311 = vadd.f32 %v307, %v310
    %312 = vst [vmem:[#allocation8] sm:$0x1] %v311
    // Predicated region
    $region26: #{tpu_custom_call.1} parent=1 // pred_check
      _
    $region27: #{tpu_custom_call.1} parent=1 // pred_check_branch
      %314 = sbr.rel (0) target = $region29
    $region28: #{tpu_custom_call.1} parent=1 // pred_region
      %s316 = ssub.s32 16, 16
      %317 = vsyncadd [#allocation4], %s316
      %s319 = sshll.u32 [#allocation8], 4
      %s320 = int_to_ptr.vmem [resolvable:$true] %s319
      %322 = dma.vmem_to_hbm [thread:$0]  %s320, 16, %s3, [#allocation4]
    $region29: #{tpu_custom_call.1} parent=1 // pred_fallthru
      _
    // Predicated region
    $region30: #{tpu_custom_call.1} parent=1 // pred_check
      _
    $region31: #{tpu_custom_call.1} parent=1 // pred_check_branch
      %324 = sbr.rel (0) target = $region33
    $region32: #{tpu_custom_call.1} parent=1 // pred_region
      %325 = dma.done [#allocation4], 16
    $region33: #{tpu_custom_call.1} parent=1 // pred_fallthru
      _
    %326 = vsyncpa [#allocation3], 1
    %327 = vsyncpa [#allocation6], 1
    %328 = vsyncpa [#allocation4], 1

</llo_original>
